<compile_context>
chip_gen: v7x
topology: tpu7x:2x2x1
jax: 0.10.0
libtpu: 0.0.40
codegen_flags: <defaults>
</compile_context>

<pallas_src>
import functools

import jax
import jax.numpy as jnp
from jax.experimental import pallas as pl
from jax.experimental.pallas import tpu as pltpu

_LANES = 128
_SUBLANES = 8
_MAX_TILE_ROWS = 2048   # 2048 * 128 * 4B = 1 MiB per f32 input tile
_NUM_CORES = 2          # split of the streaming range (megacore on v7x)


def _round_up(x: int, m: int) -> int:
    return (x + m - 1) // m * m


def _rmse_partial_kernel(yhat_ref, y_ref, out_ref, *,
                         tile_rows: int, rows: int, blocks_per_core: int):
    """Accumulates per-core partial sums of squared error into an (8,128) block."""
    c = pl.program_id(0)   # core-split axis ("parallel")
    i = pl.program_id(1)   # streaming / reduction axis ("arbitrary")

    @pl.when(i == 0)
    def _init():
        out_ref[...] = jnp.zeros_like(out_ref)

    d = yhat_ref[...].astype(jnp.float32) - y_ref[...].astype(jnp.float32)
    d2 = d * d

    # Mask rows beyond the real array extent (ragged last block and clamped
    # duplicate blocks on the last core).  Uses the *unclamped* logical block
    # index so duplicates contribute exactly zero.
    blk = c * blocks_per_core + i
    row_ids = blk * tile_rows + jax.lax.broadcasted_iota(
        jnp.int32, (tile_rows, _LANES), 0)
    d2 = jnp.where(row_ids < rows, d2, jnp.float32(0.0))

    # Reduce (tile_rows, 128) -> (8, 128): pure VPU adds (no cross-lane XLU
    # work), accumulated into the resident output block.
    out_ref[...] += jnp.sum(
        d2.reshape(tile_rows // _SUBLANES, _SUBLANES, _LANES), axis=0)


@functools.partial(jax.jit, static_argnames=("eps",))
def rmse_loss(yhat: jax.Array, y: jax.Array, eps: float = 1e-7) -> jax.Array:
    assert yhat.shape == y.shape, "yhat and y must have identical shapes"
    n_elems = yhat.size

    # Flatten; view as (rows, 128).  No copy when n_elems % 128 == 0 (the
    # common case) -- the reshape is a pure metadata op under jit.
    yhat_flat = yhat.reshape(-1)
    y_flat = y.reshape(-1)
    rows = pl.cdiv(n_elems, _LANES)
    pad = rows * _LANES - n_elems
    if pad:
        # TODO(synk): rare ragged case (<128 tail elems) still pads; the tail
        # zeros contribute 0 to the squared-error sum, so semantics hold.
        yhat_flat = jnp.pad(yhat_flat, (0, pad))
        y_flat = jnp.pad(y_flat, (0, pad))
    yhat2d = yhat_flat.reshape(rows, _LANES)
    y2d = y_flat.reshape(rows, _LANES)

    tile_rows = min(_MAX_TILE_ROWS, _round_up(rows, _SUBLANES))
    num_blocks = pl.cdiv(rows, tile_rows)
    blocks_per_core = pl.cdiv(num_blocks, _NUM_CORES)

    def in_map(c, i):
        # Clamp so a core never issues a fully out-of-bounds DMA; clamped
        # duplicate blocks are zeroed out by the in-kernel row mask.
        return (jnp.minimum(c * blocks_per_core + i, num_blocks - 1), 0)

    kernel = functools.partial(
        _rmse_partial_kernel,
        tile_rows=tile_rows, rows=rows, blocks_per_core=blocks_per_core)

    in_bytes = n_elems * (yhat.dtype.itemsize + y.dtype.itemsize)
    out_bytes = _NUM_CORES * _SUBLANES * _LANES * 4
    cost = pl.CostEstimate(
        flops=3 * n_elems,            # sub, mul, add per element
        transcendentals=0,
        bytes_accessed=in_bytes + out_bytes)

    partials = pl.pallas_call(
        kernel,
        out_shape=jax.ShapeDtypeStruct((_NUM_CORES * _SUBLANES, _LANES),
                                       jnp.float32),
        grid_spec=pltpu.PrefetchScalarGridSpec(
            num_scalar_prefetch=0,
            grid=(_NUM_CORES, blocks_per_core),
            in_specs=[
                pl.BlockSpec((tile_rows, _LANES), in_map),
                pl.BlockSpec((tile_rows, _LANES), in_map),
            ],
            out_specs=pl.BlockSpec((_SUBLANES, _LANES), lambda c, i: (c, 0)),
        ),
        compiler_params=pltpu.CompilerParams(
            dimension_semantics=("parallel", "arbitrary"),
        ),
        cost_estimate=cost,
    )(yhat2d, y2d)

    # Tiny finalize: one cross-lane reduce over 2*(8,128), divide, sqrt.
    mse = jnp.sum(partials) / jnp.float32(n_elems)
    return jnp.sqrt(mse + jnp.float32(eps))


if __name__ == "__main__":
    key = jax.random.PRNGKey(0)
    k1, k2 = jax.random.split(key)

    # Small prediction/target pair consistent with a generic regression loss.
    shape = (2, 4, 16, 16)
    yhat = jax.random.normal(k1, shape, dtype=jnp.float32)
    y = jax.random.normal(k2, shape, dtype=jnp.float32)

    loss = rmse_loss(yhat, y)
    loss = jax.block_until_ready(loss)

    # Pure-JAX reference check.
    ref = jnp.sqrt(jnp.mean((yhat - y) ** 2) + 1e-7)
    assert jnp.allclose(loss, ref, rtol=1e-6, atol=1e-6), (loss, ref)

    print("KERNEL_OK")
</pallas_src>

<mosaic_0001>
module attributes {stable_mosaic.version = 11 : i64} {
  func.func @_rmse_partial_kernel(%arg0: i32, %arg1: i32, %arg2: memref<16x128xf32, #tpu.memory_space<vmem>>, %arg3: memref<16x128xf32, #tpu.memory_space<vmem>>, %arg4: memref<8x128xf32, #tpu.memory_space<vmem>>) attributes {dimension_semantics = [#tpu.dimension_semantics<parallel>, #tpu.dimension_semantics<arbitrary>], iteration_bounds = array<i64: 2, 1>, scalar_prefetch = 0 : i64, scratch_operands = 0 : i64, tpu.core_type = #tpu.core_type<tc>, window_params = [{transform_indices = @transform_0, window_bounds = array<i64: 16, 128>}, {transform_indices = @transform_1, window_bounds = array<i64: 16, 128>}, {transform_indices = @transform_2, window_bounds = array<i64: 8, 128>}]} {
    %c0_i32 = arith.constant 0 : i32
    %0 = arith.cmpi eq, %arg1, %c0_i32 : i32
    %1 = arith.extui %0 : i1 to i32
    %c0_i32_0 = arith.constant 0 : i32
    %2 = arith.cmpi ne, %1, %c0_i32_0 : i32
    scf.if %2 {
      %cst_10 = arith.constant 0.000000e+00 : f32
      %22 = vector.broadcast %cst_10 : f32 to vector<8x128xf32>
      %c0_11 = arith.constant 0 : index
      %c0_12 = arith.constant 0 : index
      %23 = vector.load %arg4[%c0_11, %c0_12] : memref<8x128xf32, #tpu.memory_space<vmem>>, vector<8x128xf32>
      tpu.vector_store %arg4[%c0_11, %c0_12], %22 {strides = array<i32>} : memref<8x128xf32, #tpu.memory_space<vmem>>, vector<8x128xf32>,
    } else {
    }
    %c0 = arith.constant 0 : index
    %c0_1 = arith.constant 0 : index
    %3 = vector.load %arg2[%c0, %c0_1] : memref<16x128xf32, #tpu.memory_space<vmem>>, vector<16x128xf32>
    %c0_2 = arith.constant 0 : index
    %c0_3 = arith.constant 0 : index
    %4 = vector.load %arg3[%c0_2, %c0_3] : memref<16x128xf32, #tpu.memory_space<vmem>>, vector<16x128xf32>
    %5 = arith.subf %3, %4 : vector<16x128xf32>
    %6 = arith.mulf %5, %5 : vector<16x128xf32>
    %c1_i32 = arith.constant 1 : i32
    %7 = arith.muli %arg0, %c1_i32 : i32
    %8 = arith.addi %7, %arg1 : i32
    %c16_i32 = arith.constant 16 : i32
    %9 = arith.muli %8, %c16_i32 : i32
    %10 = tpu.iota {dimensions = array<i32: 0>} : vector<16x128xi32>
    %11 = vector.broadcast %9 : i32 to vector<16x128xi32>
    %12 = arith.addi %11, %10 : vector<16x128xi32>
    %c16_i32_4 = arith.constant 16 : i32
    %13 = vector.broadcast %c16_i32_4 : i32 to vector<16x128xi32>
    %14 = arith.cmpi slt, %12, %13 : vector<16x128xi32>
    %cst = arith.constant 0.000000e+00 : f32
    %15 = vector.broadcast %cst : f32 to vector<16x128xf32>
    %16 = arith.select %14, %6, %15 : vector<16x128xi1>, vector<16x128xf32>
    %c0_5 = arith.constant 0 : index
    %c0_6 = arith.constant 0 : index
    %17 = vector.load %arg4[%c0_5, %c0_6] : memref<8x128xf32, #tpu.memory_space<vmem>>, vector<8x128xf32>
    %18 = vector.shape_cast %16 : vector<16x128xf32> to vector<2x8x128xf32>
    %cst_7 = arith.constant dense<0.000000e+00> : vector<8x128xf32>
    %19 = vector.multi_reduction <add>, %18, %cst_7 [0] : vector<2x8x128xf32> to vector<8x128xf32>
    %20 = arith.addf %17, %19 : vector<8x128xf32>
    %c0_8 = arith.constant 0 : index
    %c0_9 = arith.constant 0 : index
    %21 = vector.load %arg4[%c0_8, %c0_9] : memref<8x128xf32, #tpu.memory_space<vmem>>, vector<8x128xf32>
    tpu.vector_store %arg4[%c0_8, %c0_9], %20 {strides = array<i32>} : memref<8x128xf32, #tpu.memory_space<vmem>>, vector<8x128xf32>,
    return
  }
  func.func @transform_0(%arg0: i32, %arg1: i32) -> (i32, i32) {
    %c1_i32 = arith.constant 1 : i32
    %0 = arith.muli %arg0, %c1_i32 : i32
    %1 = arith.addi %0, %arg1 : i32
    %c0_i32 = arith.constant 0 : i32
    %2 = arith.minsi %1, %c0_i32 : i32
    %c0_i32_0 = arith.constant 0 : i32
    %c0_i32_1 = arith.constant 0 : i32
    return %2, %c0_i32_0 : i32, i32
  }
  func.func @transform_1(%arg0: i32, %arg1: i32) -> (i32, i32) {
    %c1_i32 = arith.constant 1 : i32
    %0 = arith.muli %arg0, %c1_i32 : i32
    %1 = arith.addi %0, %arg1 : i32
    %c0_i32 = arith.constant 0 : i32
    %2 = arith.minsi %1, %c0_i32 : i32
    %c0_i32_0 = arith.constant 0 : i32
    %c0_i32_1 = arith.constant 0 : i32
    return %2, %c0_i32_0 : i32, i32
  }
  func.func @transform_2(%arg0: i32, %arg1: i32) -> (i32, i32) {
    %c0_i32 = arith.constant 0 : i32
    %c0_i32_0 = arith.constant 0 : i32
    return %arg0, %c0_i32 : i32, i32
  }
}

</mosaic_0001>

<llo_original>
// kernel: rmse_loss.1
$region0: #{rmse_loss.1}
  #allocation0 [shape = 'u32[]', space=smem, size = 0x4, offset = 0x4, fixed_abs, tag = 'smem constant byte address 0x4 - core index']
  #allocation1 [shape = 'u32[144,128]{1,0:T(1,128)}', space=vmem, size = 0x12000, scoped, tag = 'internal scratch']
  %s0 = inlined_call_operand.vmem [shape: f32[16,128], index: 0, kind: input, shape index: {}]
  %s1 = inlined_call_operand.vmem [shape: f32[16,128], index: 1, kind: input, shape index: {}]
  %s2 = inlined_call_operand.vmem [shape: f32[16,128], index: 2, kind: output, shape index: {}]
  %s3 = sld [smem:[#allocation0]]
  $region45: #{rmse_loss.1} parent=0
    _
  %s5 = ssub.s32 1, %s3
  %s6 = scalar_select 0, %s5, %s3
  loop: start=0, step=1, limit=4
  $region2: #{rmse_loss.1} parent=0 // loop_pre_header
    _
  $region3: #{rmse_loss.1} parent=0 // loop_header
    %s8 = sphi 0, %s12
    %p9 = scmp.ge.s32.totalorder %s8, 4
    %s15 = sphi 0, %s27
    %s16 = sphi 0, %s23
    %s17 = sphi 0, %s15
    %s18 = sphi 0, %s16
    %s19 = sphi 0, %s17
    %s20 = sphi 0, %s18
    %s36 = sphi 0, %s38
    %s39 = sphi 0, %s36
    %s40 = sphi 0, %s39
    %s56 = sphi 0, %s40
    %s68 = sphi 0, %s70
    %s71 = sphi 0, %s68
    %s72 = sphi 0, %s71
    %s88 = sphi 0, %s72
    %s94 = sphi 0, %s96
    %s97 = sphi 0, %s94
    %s98 = sphi 0, %s97
    %s114 = sphi 0, %s98
  $region4: #{rmse_loss.1} parent=0 // loop_header_branch
    %11 = sbr.rel (%p9) target = $region8
  $region5: #{rmse_loss.1} parent=0 // loop_body
    %s13 = ssub.s32 %s8, 1
    %s14 = ssub.s32 %s8, 2
    %s21 = sadd.s32 1, %s16
    %p22 = scmp.ge.s32.totalorder %s21, 1
    %s23 = scalar_select %p22, 0, %s21
    %s24 = sadd.s32 1, %s15
    %s25 = scalar_select %p22, %s24, %s15
    %p26 = scmp.ge.s32.totalorder %s25, 2
    %s27 = scalar_select %p26, 0, %s25
    %s28 = sadd.s32 %s15, %s16
    %p29 = scmp.lt.s32.totalorder %s28, 0
    %s30 = scalar_select %p29, %s28, 0
    %s31 = sadd.s32 %s27, %s23
    %p32 = scmp.lt.s32.totalorder %s31, 0
    %s33 = scalar_select %p32, %s31, 0
    %s34 = ssub.s32 %s30, %s33
    %p35 = scmp.eq.s32.totalorder %s34, 0
    %s37 = sadd.s32 %s36, 1
    %s38 = scalar_select %p35, %s36, %s37
    %p41 = pneg %p35
    %p42 = scmp.eq.s32.totalorder %s8, 1
    %p43 = por %p41, %p42
    %p44 = scmp.ne.s32.totalorder %s36, %s39
    %p45 = scmp.eq.s32.totalorder %s8, 0
    %p46 = por %p44, %p45
    %p47 = scmp.ne.s32.totalorder %s36, %s39
    %p48 = scmp.eq.s32.totalorder %s13, 1
    %p49 = por %p47, %p48
    %p50 = scmp.ne.s32.totalorder %s39, %s40
    %p51 = scmp.eq.s32.totalorder %s13, 0
    %p52 = por %p50, %p51
    %p53 = scmp.ne.s32.totalorder %s39, %s40
    %p54 = scmp.eq.s32.totalorder %s14, 1
    %p55 = por %p53, %p54
    %p57 = scmp.ne.s32.totalorder %s40, %s56
    %p58 = scmp.eq.s32.totalorder %s14, 0
    %p59 = por %p57, %p58
    %s60 = sadd.s32 %s15, %s16
    %p61 = scmp.lt.s32.totalorder %s60, 0
    %s62 = scalar_select %p61, %s60, 0
    %s63 = sadd.s32 %s27, %s23
    %p64 = scmp.lt.s32.totalorder %s63, 0
    %s65 = scalar_select %p64, %s63, 0
    %s66 = ssub.s32 %s62, %s65
    %p67 = scmp.eq.s32.totalorder %s66, 0
    %s69 = sadd.s32 %s68, 1
    %s70 = scalar_select %p67, %s68, %s69
    %p73 = pneg %p67
    %p74 = scmp.eq.s32.totalorder %s8, 1
    %p75 = por %p73, %p74
    %p76 = scmp.ne.s32.totalorder %s68, %s71
    %p77 = scmp.eq.s32.totalorder %s8, 0
    %p78 = por %p76, %p77
    %p79 = scmp.ne.s32.totalorder %s68, %s71
    %p80 = scmp.eq.s32.totalorder %s13, 1
    %p81 = por %p79, %p80
    %p82 = scmp.ne.s32.totalorder %s71, %s72
    %p83 = scmp.eq.s32.totalorder %s13, 0
    %p84 = por %p82, %p83
    %p85 = scmp.ne.s32.totalorder %s71, %s72
    %p86 = scmp.eq.s32.totalorder %s14, 1
    %p87 = por %p85, %p86
    %p89 = scmp.ne.s32.totalorder %s72, %s88
    %p90 = scmp.eq.s32.totalorder %s14, 0
    %p91 = por %p89, %p90
    %s92 = ssub.s32 %s15, %s27
    %p93 = scmp.eq.s32.totalorder %s92, 0
    %s95 = sadd.s32 %s94, 1
    %s96 = scalar_select %p93, %s94, %s95
    %p99 = pneg %p93
    %p100 = scmp.eq.s32.totalorder %s8, 1
    %p101 = por %p99, %p100
    %p102 = scmp.ne.s32.totalorder %s94, %s97
    %p103 = scmp.eq.s32.totalorder %s8, 0
    %p104 = por %p102, %p103
    %p105 = scmp.ne.s32.totalorder %s94, %s97
    %p106 = scmp.eq.s32.totalorder %s13, 1
    %p107 = por %p105, %p106
    %p108 = scmp.ne.s32.totalorder %s97, %s98
    %p109 = scmp.eq.s32.totalorder %s13, 0
    %p110 = por %p108, %p109
    %p111 = scmp.ne.s32.totalorder %s97, %s98
    %p112 = scmp.eq.s32.totalorder %s14, 1
    %p113 = por %p111, %p112
    %p115 = scmp.ne.s32.totalorder %s98, %s114
    %p116 = scmp.eq.s32.totalorder %s14, 0
    %p117 = por %p115, %p116
    %p118 = scmp.le.s32.totalorder 1, %s8
    %p119 = scmp.lt.s32.totalorder %s8, 3
    %p120 = pnand %p118, %p119
    %p121 = pneg %p120
    // Predicated region
    $region9: #{rmse_loss.1} parent=5 // pred_check
      _
    $region10: #{rmse_loss.1} parent=5 // pred_check_branch
      %123 = sbr.rel (%p120) target = $region12
    $region11: #{rmse_loss.1} parent=5 // pred_region
      %s124 = ssub.s32 %s8, 1
    $region12: #{rmse_loss.1} parent=5 // pred_fallthru
      _
    %p125 = scmp.lt.s32.totalorder %s8, 2
    // Predicated region
    $region13: #{rmse_loss.1} parent=5 // pred_check
      %p126 = pneg %p125
    $region14: #{rmse_loss.1} parent=5 // pred_check_branch
      %128 = sbr.rel (%p126) target = $region16
    $region15: #{rmse_loss.1} parent=5 // pred_region
      // Predicated region
      $region17: #{rmse_loss.1} parent=15 // pred_check
        %p129 = pneg %p46
      $region18: #{rmse_loss.1} parent=15 // pred_check_branch
        %131 = sbr.rel (%p129) target = $region20
      $region19: #{rmse_loss.1} parent=15 // pred_region
        %s132 = sadd.s32 %s15, %s16
        %p133 = scmp.lt.s32.totalorder %s132, 0
        %s134 = scalar_select %p133, %s132, 0
        %s135 = smul.u32 2, %s134
        %p136 = scmp.lt.s32.totalorder %s135, 1
        %s137 = scalar_select %p136, %s135, 1
        %s138 = smul.addr %s137, 8
        %s139 = scalar_lea.vmem %s0, %s138
        %s140 = sadd.s32 %s15, %s16
        %p141 = scmp.lt.s32.totalorder %s140, 0
        %s142 = scalar_select %p141, %s140, 0
        %s143 = smul.u32 2, %s142
      $region20: #{rmse_loss.1} parent=15 // pred_fallthru
        _
      // Predicated region
      $region21: #{rmse_loss.1} parent=15 // pred_check
        %p144 = pneg %p78
      $region22: #{rmse_loss.1} parent=15 // pred_check_branch
        %146 = sbr.rel (%p144) target = $region24
      $region23: #{rmse_loss.1} parent=15 // pred_region
        %s147 = sadd.s32 %s15, %s16
        %p148 = scmp.lt.s32.totalorder %s147, 0
        %s149 = scalar_select %p148, %s147, 0
        %s150 = smul.u32 2, %s149
        %p151 = scmp.lt.s32.totalorder %s150, 1
        %s152 = scalar_select %p151, %s150, 1
        %s153 = smul.addr %s152, 8
        %s154 = scalar_lea.vmem %s1, %s153
        %s155 = sadd.s32 %s15, %s16
        %p156 = scmp.lt.s32.totalorder %s155, 0
        %s157 = scalar_select %p156, %s155, 0
        %s158 = smul.u32 2, %s157
      $region24: #{rmse_loss.1} parent=15 // pred_fallthru
        _
    $region16: #{rmse_loss.1} parent=5 // pred_fallthru
      _
    %p159 = scmp.le.s32.totalorder 1, %s8
    %p160 = scmp.lt.s32.totalorder %s8, 3
    %p161 = pnand %p159, %p160
    %p162 = pneg %p161
    // Predicated region
    $region25: #{rmse_loss.1} parent=5 // pred_check
      _
    $region26: #{rmse_loss.1} parent=5 // pred_check_branch
      %164 = sbr.rel (%p161) target = $region28
    $region27: #{rmse_loss.1} parent=5 // pred_region
      %s165 = ssub.s32 %s8, 1
      %s166 = sadd.s32 %s17, %s18
      %p167 = scmp.lt.s32.totalorder %s166, 0
      %s168 = scalar_select %p167, %s166, 0
      %s169 = smul.u32 2, %s168
      %p170 = scmp.lt.s32.totalorder %s169, 1
      %s171 = scalar_select %p170, %s169, 1
      %s172 = smul.addr %s171, 8
      %s173 = scalar_lea.vmem %s0, %s172
      %p174 = pneg %p52
      %p175 = pneg %p49
      %s176 = sadd.s32 %s17, %s18
      %p177 = scmp.lt.s32.totalorder %s176, 0
      %s178 = scalar_select %p177, %s176, 0
      %s179 = smul.u32 2, %s178
      %p180 = scmp.lt.s32.totalorder %s179, 1
      %s181 = scalar_select %p180, %s179, 1
      %s182 = smul.addr %s181, 8
      %s183 = scalar_lea.vmem %s1, %s182
      %p184 = pneg %p84
      %p185 = pneg %p81
      %p186 = pneg %p110
      %p187 = pneg %p107
      %p188 = scmp.lt.s32.totalorder %s17, 1
      %s189 = scalar_select %p188, %s17, 1
      %s190 = smul.addr %s189, 8
      %s191 = scalar_lea.vmem %s2, %s190
      %s192 = sadd.s32 %s17, %s18
      %p193 = scmp.lt.s32.totalorder %s192, 0
      %s194 = scalar_select %p193, %s192, 0
      %s195 = smul.u32 2, %s194
      %p196 = scmp.lt.s32.totalorder %s195, 1
      %s197 = scalar_select %p196, %s195, 1
      %s198 = smul.addr %s197, 8
      %s199 = scalar_lea.vmem %s0, %s198
      %s200 = sadd.s32 %s17, %s18
      %p201 = scmp.lt.s32.totalorder %s200, 0
      %s202 = scalar_select %p201, %s200, 0
      %s203 = smul.u32 2, %s202
      %s204 = sadd.s32 %s17, %s18
      %p205 = scmp.lt.s32.totalorder %s204, 0
      %s206 = scalar_select %p205, %s204, 0
      %s207 = smul.u32 2, %s206
      %p208 = scmp.lt.s32.totalorder %s207, 1
      %s209 = scalar_select %p208, %s207, 1
      %s210 = smul.addr %s209, 8
      %s211 = scalar_lea.vmem %s1, %s210
      %s212 = sadd.s32 %s17, %s18
      %p213 = scmp.lt.s32.totalorder %s212, 0
      %s214 = scalar_select %p213, %s212, 0
      %s215 = smul.u32 2, %s214
      %p216 = scmp.lt.s32.totalorder %s17, 1
      %s217 = scalar_select %p216, %s17, 1
      %s218 = smul.addr %s217, 8
      %s219 = scalar_lea.vmem %s2, %s218
      %p220 = scmp.eq.s32.totalorder %s18, 0
      // Predicated region
      $region29: #{rmse_loss.1} parent=27 // pred_check
        %p221 = pneg %p220
      $region30: #{rmse_loss.1} parent=27 // pred_check_branch
        %223 = sbr.rel (%p221) target = $region32
      $region31: #{rmse_loss.1} parent=27 // pred_region
        %224 = vst [vmem:[%s219] sm:$0xff] 0.0
      $region32: #{rmse_loss.1} parent=27 // pred_fallthru
        _
      %v225 = vld [vmem:[%s199] sm:$0xff]
      %v226 = vld [vmem:[%s199 + $0x8] sm:$0xff]
      %v227 = vld [vmem:[%s211] sm:$0xff]
      %v228 = vld [vmem:[%s211 + $0x8] sm:$0xff]
      %v229 = vsub.f32 %v225, %v227
      %v230 = vsub.f32 %v226, %v228
      %v231 = vmul.f32 %v229, %v229
      %v232 = vmul.f32 %v230, %v230
      %s233 = sadd.s32 %s17, %s18
      %s234 = smul.u32 %s233, 16
      %v235 = vlaneseq
      %v236 = vshrl.u32 %v235, 7
      %v237 = vadd.s32 %v236, 8
      %v238 = vstv %s234
      %v239 = vadd.s32 %v238, %v236
      %v240 = vadd.s32 %v238, %v237
      %vm241 = vcmp.lt.s32.totalorder %v239, 16
      %vm242 = vcmp.lt.s32.totalorder %v240, 16
      %v243 = vsel %vm241, %v231, 0.0
      %v244 = vsel %vm242, %v232, 0.0
      %v245 = vld [vmem:[%s219] sm:$0xff]
      %v246 = vadd.f32 %v243, %v244
      %v247 = vadd.f32 %v245, %v246
      %248 = vst [vmem:[%s219] sm:$0xff] %v247
      %p249 = scmp.lt.s32.totalorder %s17, 1
      %s250 = scalar_select %p249, %s17, 1
      %s251 = smul.addr %s250, 8
      %s252 = scalar_lea.vmem %s2, %s251
      // Predicated region
      $region33: #{rmse_loss.1} parent=27 // pred_check
        %p253 = pneg %p107
      $region34: #{rmse_loss.1} parent=27 // pred_check_branch
        %255 = sbr.rel (%p253) target = $region36
      $region35: #{rmse_loss.1} parent=27 // pred_region
        _
      $region36: #{rmse_loss.1} parent=27 // pred_fallthru
        _
    $region28: #{rmse_loss.1} parent=5 // pred_fallthru
      _
    %p256 = scmp.le.s32.totalorder 2, %s8
    // Predicated region
    $region37: #{rmse_loss.1} parent=5 // pred_check
      %p257 = pneg %p256
    $region38: #{rmse_loss.1} parent=5 // pred_check_branch
      %259 = sbr.rel (%p257) target = $region40
    $region39: #{rmse_loss.1} parent=5 // pred_region
      %s260 = ssub.s32 %s8, 2
      // Predicated region
      $region41: #{rmse_loss.1} parent=39 // pred_check
        %p261 = pneg %p113
      $region42: #{rmse_loss.1} parent=39 // pred_check_branch
        %263 = sbr.rel (%p261) target = $region44
      $region43: #{rmse_loss.1} parent=39 // pred_region
        %p264 = scmp.lt.s32.totalorder %s19, 1
        %s265 = scalar_select %p264, %s19, 1
        %s266 = smul.addr %s265, 8
        %s267 = scalar_lea.vmem %s2, %s266
      $region44: #{rmse_loss.1} parent=39 // pred_fallthru
        _
    $region40: #{rmse_loss.1} parent=5 // pred_fallthru
      _
  $region6: #{rmse_loss.1} parent=0 // loop_footer
    %s12 = sadd.s32 1, %s8
  $region7: #{rmse_loss.1} parent=0 // loop_footer_branch
    %7 = sbr.rel target = $region3
  $region8: #{rmse_loss.1} parent=0 // loop_exit
    _

</llo_original>
